<compile_context>
chip_gen: v5e
topology: v5e:2x2
jax: 0.10.0
libtpu: 0.0.40
codegen_flags: <defaults>
</compile_context>

<pallas_src>
import functools

import jax
import jax.numpy as jnp
from jax.experimental import pallas as pl
from jax.experimental.pallas import tpu as pltpu


_NEG_INF = -1e30  # finite large-negative (torch uses -inf; finite avoids NaN
                  # for fully-padded rows while being identical in practice)


# ----------------------------- Pallas kernels ------------------------------ #

def linear_kernel(x_ref, w_ref, b_ref, o_ref):
    # x: (tm, Din), w: (Din, Dout) resident, b: (1, Dout)
    acc = jnp.dot(x_ref[...], w_ref[...], preferred_element_type=jnp.float32)
    o_ref[...] = (acc + b_ref[...]).astype(o_ref.dtype)


def qkv_kernel(x_ref, w_ref, b_ref, q_ref, k_ref, v_ref):
    # Fused Q/K/V projection: x is read once per tile, the (3, Din, Dout)
    # weight stack stays resident across the M grid.
    x = x_ref[...]
    for i, out_ref in enumerate((q_ref, k_ref, v_ref)):
        acc = jnp.dot(x, w_ref[i], preferred_element_type=jnp.float32)
        out_ref[...] = (acc + b_ref[i]).astype(out_ref.dtype)


def attn_kernel(q_ref, k_ref, v_ref, mask_ref, pad_ref, o_ref, *,
                scale, num_head, head_dim):
    # blocks: q (1, Lq, D), k/v (1, Lk, D), mask (Lq, Lk), pad (1, 1, Lk),
    #         o (1, Lq, D) with D = num_head * head_dim (lane-dense output).
    q = q_ref[0].astype(jnp.float32) * scale        # (Lq, D)
    k = k_ref[0].astype(jnp.float32)                # (Lk, D)
    v = v_ref[0].astype(jnp.float32)                # (Lk, D)

    # Build the additive bias in-kernel (no (B*H, Lq, Lk) HBM round-trip).
    bias = mask_ref[...].astype(jnp.float32)        # (Lq, Lk)
    pad = pad_ref[0]                                # (1, Lk) float, 1.0 = pad
    bias = bias + jnp.where(pad > 0.0, _NEG_INF, 0.0)

    outs = []
    for h in range(num_head):                       # static unrolled loop
        lo = h * head_dim
        q_h = q[:, lo:lo + head_dim]                # (Lq, hd) static lane slice
        k_h = k[:, lo:lo + head_dim]
        v_h = v[:, lo:lo + head_dim]
        # transposed-RHS dot_general: contract last dims, no k.T relayout
        s = jax.lax.dot_general(q_h, k_h, (((1,), (1,)), ((), ())),
                                preferred_element_type=jnp.float32) + bias
        s = s - jnp.max(s, axis=-1, keepdims=True)
        p = jnp.exp(s)
        denom = jnp.sum(p, axis=-1, keepdims=True)
        r = pl.reciprocal(denom, approx=True)       # EUP slot, nearly free
        r = r * (2.0 - denom * r)                   # one Newton step -> ~f32
        p = p * r
        outs.append(jnp.dot(p, v_h, preferred_element_type=jnp.float32))
    # single full-width (Lq, D) store instead of per-head masked stores
    o_ref[0] = jnp.concatenate(outs, axis=-1).astype(o_ref.dtype)


# ------------------------------ JAX wrappers -------------------------------- #

def pallas_linear(x2d, w, b, *, tm=512):
    """y = x2d @ w + b, tiled over M with a resident weight block."""
    M, Din = x2d.shape
    Dout = w.shape[1]
    tm = min(tm, M)                       # full-dim tile for small M
    grid_m = pl.cdiv(M, tm)
    return pl.pallas_call(
        linear_kernel,
        out_shape=jax.ShapeDtypeStruct((M, Dout), x2d.dtype),
        grid=(grid_m,),
        in_specs=[
            pl.BlockSpec((tm, Din), lambda i: (i, 0)),
            pl.BlockSpec((Din, Dout), lambda i: (0, 0)),   # weight resident
            pl.BlockSpec((1, Dout), lambda i: (0, 0)),
        ],
        out_specs=pl.BlockSpec((tm, Dout), lambda i: (i, 0)),
        compiler_params=pltpu.CompilerParams(
            dimension_semantics=("parallel",)),
    )(x2d, w, b)


def pallas_qkv(x2d, w3, b3, *, tm=512):
    """Fused q/k/v projection: x read once, three outputs. w3: (3, Din, Dout)."""
    M, Din = x2d.shape
    Dout = w3.shape[2]
    tm = min(tm, M)
    grid_m = pl.cdiv(M, tm)
    out_sd = jax.ShapeDtypeStruct((M, Dout), x2d.dtype)
    return pl.pallas_call(
        qkv_kernel,
        out_shape=(out_sd, out_sd, out_sd),
        grid=(grid_m,),
        in_specs=[
            pl.BlockSpec((tm, Din), lambda i: (i, 0)),
            pl.BlockSpec((3, Din, Dout), lambda i: (0, 0, 0)),
            pl.BlockSpec((3, 1, Dout), lambda i: (0, 0, 0)),
        ],
        out_specs=(pl.BlockSpec((tm, Dout), lambda i: (i, 0)),) * 3,
        compiler_params=pltpu.CompilerParams(
            dimension_semantics=("parallel",)),
    )(x2d, w3, b3)


def pallas_attention(q, k, v, att_mask, pad_mask, scale, num_head, head_dim):
    """q: (B, Lq, D), k/v: (B, Lk, D), att_mask: (Lq, Lk), pad_mask: (B, 1, Lk)."""
    B, Lq, D = q.shape
    Lk = k.shape[1]
    kern = functools.partial(attn_kernel, scale=scale,
                             num_head=num_head, head_dim=head_dim)
    return pl.pallas_call(
        kern,
        out_shape=jax.ShapeDtypeStruct((B, Lq, D), q.dtype),
        grid=(B,),                      # all heads of one batch elt per step
        in_specs=[
            pl.BlockSpec((1, Lq, D), lambda b: (b, 0, 0)),
            pl.BlockSpec((1, Lk, D), lambda b: (b, 0, 0)),
            pl.BlockSpec((1, Lk, D), lambda b: (b, 0, 0)),
            pl.BlockSpec((Lq, Lk), lambda b: (0, 0)),      # shared across grid
            pl.BlockSpec((1, 1, Lk), lambda b: (b, 0, 0)),
        ],
        out_specs=pl.BlockSpec((1, Lq, D), lambda b: (b, 0, 0)),
        compiler_params=pltpu.CompilerParams(
            dimension_semantics=("parallel",)),
    )(q, k, v, att_mask, pad_mask)


class MultiheadAttentionPallas:
    def __init__(self, d_model, num_head, dropout, key):
        assert d_model % num_head == 0
        self.d_model = d_model
        self.num_head = num_head
        self.head_dim = d_model // num_head
        self.dropout = dropout  # inference mode -> unused

        ks = jax.random.split(key, 8)
        # xavier_uniform bound for square (d_model, d_model) weights
        xav = (6.0 / (d_model + d_model)) ** 0.5
        # torch Linear bias default: U(-1/sqrt(fan_in), 1/sqrt(fan_in))
        bb = 1.0 / (d_model ** 0.5)

        def w(k):  # stored as (Din, Dout) = W.T relative to torch
            return jax.random.uniform(k, (d_model, d_model), jnp.float32, -xav, xav)

        def b(k):
            return jax.random.uniform(k, (1, d_model), jnp.float32, -bb, bb)

        self.wq, self.bq = w(ks[0]), b(ks[1])
        self.wk, self.bk = w(ks[2]), b(ks[3])
        self.wv, self.bv = w(ks[4]), b(ks[5])
        self.wo, self.bo = w(ks[6]), b(ks[7])

        # fused stacks for the self-attention fast path
        self.w_qkv = jnp.stack([self.wq, self.wk, self.wv])   # (3, D, D)
        self.b_qkv = jnp.stack([self.bq, self.bk, self.bv])   # (3, 1, D)

    def __call__(self, query, key, value, att_mask=None, key_pad_mask=None):
        B, Lq, D = query.shape
        Lk = key.shape[1]

        # Q/K/V projections
        if (query is key) and (key is value):
            q2, k2, v2 = pallas_qkv(query.reshape(B * Lq, D),
                                    self.w_qkv, self.b_qkv)
        else:
            q2 = pallas_linear(query.reshape(B * Lq, D), self.wq, self.bq)
            k2 = pallas_linear(key.reshape(B * Lk, D), self.wk, self.bk)
            v2 = pallas_linear(value.reshape(B * Lk, D), self.wv, self.bv)
        q = q2.reshape(B, Lq, D)
        k = k2.reshape(B, Lk, D)
        v = v2.reshape(B, Lk, D)

        # Tiny mask operands; the full additive bias is built inside the kernel.
        if att_mask is None:
            att_mask_f = jnp.zeros((Lq, Lk), jnp.float32)
        else:
            att_mask_f = att_mask.astype(jnp.float32)        # additive (Lq, Lk)
        if key_pad_mask is None:
            pad_f = jnp.zeros((B, 1, Lk), jnp.float32)
        else:
            pad_f = key_pad_mask.reshape(B, 1, Lk).astype(jnp.float32)

        scale = float(self.head_dim) ** (-0.5)
        attn = pallas_attention(q, k, v, att_mask_f, pad_f, scale,
                                self.num_head, self.head_dim)   # (B, Lq, D)

        out = pallas_linear(attn.reshape(B * Lq, D), self.wo, self.bo)
        return out.reshape(B, Lq, D)


# ------------------------------ pure-JAX reference --------------------------- #

def ref_forward(mha, query, key, value, att_mask=None, key_pad_mask=None):
    B, Lq, D = query.shape
    Lk = key.shape[1]
    H, hd = mha.num_head, mha.head_dim
    q = query.reshape(-1, D) @ mha.wq + mha.bq
    k = key.reshape(-1, D) @ mha.wk + mha.bk
    v = value.reshape(-1, D) @ mha.wv + mha.bv
    q = q.reshape(B, Lq, H, hd).transpose(0, 2, 1, 3) * (hd ** -0.5)
    k = k.reshape(B, Lk, H, hd).transpose(0, 2, 1, 3)
    v = v.reshape(B, Lk, H, hd).transpose(0, 2, 1, 3)
    s = q @ k.transpose(0, 1, 3, 2)                            # (B, H, Lq, Lk)
    if att_mask is not None:
        s = s + att_mask[None, None].astype(jnp.float32)
    if key_pad_mask is not None:
        s = jnp.where(key_pad_mask[:, None, None, :], _NEG_INF, s)
    p = jax.nn.softmax(s, axis=-1)
    o = (p @ v).transpose(0, 2, 1, 3).reshape(B, Lq, D)
    return (o.reshape(-1, D) @ mha.wo + mha.bo).reshape(B, Lq, D)


# ---------------------------------- main ------------------------------------ #

if __name__ == "__main__":
    d_model = 32
    num_head = 4
    dropout = 0.0
    btsz, q_len, k_len = 2, 8, 8

    root = jax.random.PRNGKey(0)
    k_param, k_x, k_q, k_k, k_v = jax.random.split(root, 5)

    mha = MultiheadAttentionPallas(d_model, num_head, dropout, k_param)

    # --- self-attention (exercises the fused QKV projection path) -----------
    x = jax.random.normal(k_x, (btsz, q_len, d_model), jnp.float32)
    out_self = mha(x, x, x)
    jax.block_until_ready(out_self)
    assert out_self.shape == (btsz, q_len, d_model)
    ref_self = ref_forward(mha, x, x, x)
    assert jnp.allclose(out_self, ref_self, atol=2e-4, rtol=2e-4)

    # --- cross-attention with masks (general path + in-kernel mask build) ---
    query = jax.random.normal(k_q, (btsz, q_len, d_model), jnp.float32)
    key = jax.random.normal(k_k, (btsz, k_len, d_model), jnp.float32)
    value = jax.random.normal(k_v, (btsz, k_len, d_model), jnp.float32)
    att_mask = jnp.where(
        jnp.triu(jnp.ones((q_len, k_len), jnp.float32), k=1) > 0, -1e9, 0.0)
    key_pad_mask = (jnp.zeros((btsz, k_len), bool)
                    .at[0, -2:].set(True)
                    .at[1, -1:].set(True))
    out_cross = mha(query, key, value, att_mask, key_pad_mask)
    jax.block_until_ready(out_cross)
    ref_cross = ref_forward(mha, query, key, value, att_mask, key_pad_mask)
    assert jnp.allclose(out_cross, ref_cross, atol=2e-4, rtol=2e-4)

    print("KERNEL_OK")
</pallas_src>

<mosaic_0001>
module attributes {stable_mosaic.version = 11 : i64} {
  func.func @qkv_kernel(%arg0: i32, %arg1: memref<16x32xf32, #tpu.memory_space<vmem>>, %arg2: memref<3x32x32xf32, #tpu.memory_space<vmem>>, %arg3: memref<3x1x32xf32, #tpu.memory_space<vmem>>, %arg4: memref<16x32xf32, #tpu.memory_space<vmem>>, %arg5: memref<16x32xf32, #tpu.memory_space<vmem>>, %arg6: memref<16x32xf32, #tpu.memory_space<vmem>>) attributes {dimension_semantics = [#tpu.dimension_semantics<parallel>], iteration_bounds = array<i64: 1>, scalar_prefetch = 0 : i64, scratch_operands = 0 : i64, tpu.core_type = #tpu.core_type<tc>, window_params = [{transform_indices = @transform_0, window_bounds = array<i64: 16, 32>}, {pipeline_mode = #tpu.pipeline_mode<synchronous>, transform_indices = @transform_1, window_bounds = array<i64: 3, 32, 32>}, {pipeline_mode = #tpu.pipeline_mode<synchronous>, transform_indices = @transform_2, window_bounds = array<i64: 3, 1, 32>}, {transform_indices = @transform_3, window_bounds = array<i64: 16, 32>}, {transform_indices = @transform_4, window_bounds = array<i64: 16, 32>}, {transform_indices = @transform_5, window_bounds = array<i64: 16, 32>}]} {
    %c0 = arith.constant 0 : index
    %c0_0 = arith.constant 0 : index
    %0 = vector.load %arg1[%c0, %c0_0] : memref<16x32xf32, #tpu.memory_space<vmem>>, vector<16x32xf32>
    %c0_1 = arith.constant 0 : index
    %c0_2 = arith.constant 0 : index
    %c0_3 = arith.constant 0 : index
    %1 = vector.load %arg2[%c0_1, %c0_2, %c0_3] : memref<3x32x32xf32, #tpu.memory_space<vmem>>, vector<1x32x32xf32>
    %2 = vector.shape_cast %1 : vector<1x32x32xf32> to vector<32x32xf32>
    %cst = arith.constant dense<0.000000e+00> : vector<16x32xf32>
    %3 = tpu.matmul %0, %2, %cst {dimension_numbers = #tpu.dot_dimension_numbers<[1], [0], [0], [1], [0, 0, 1, 1], [], []>} : vector<16x32xf32>, vector<32x32xf32>, vector<16x32xf32> -> vector<16x32xf32>
    %c0_4 = arith.constant 0 : index
    %c0_5 = arith.constant 0 : index
    %c0_6 = arith.constant 0 : index
    %4 = vector.load %arg3[%c0_4, %c0_5, %c0_6] : memref<3x1x32xf32, #tpu.memory_space<vmem>>, vector<1x1x32xf32>
    %5 = vector.shape_cast %4 : vector<1x1x32xf32> to vector<1x32xf32>
    %6 = vector.broadcast %5 : vector<1x32xf32> to vector<16x32xf32>
    %7 = arith.addf %3, %6 : vector<16x32xf32>
    %c0_7 = arith.constant 0 : index
    %c0_8 = arith.constant 0 : index
    %8 = vector.load %arg4[%c0_7, %c0_8] : memref<16x32xf32, #tpu.memory_space<vmem>>, vector<16x32xf32>
    tpu.vector_store %arg4[%c0_7, %c0_8], %7 {strides = array<i32>} : memref<16x32xf32, #tpu.memory_space<vmem>>, vector<16x32xf32>,
    %c1 = arith.constant 1 : index
    %c0_9 = arith.constant 0 : index
    %c0_10 = arith.constant 0 : index
    %9 = vector.load %arg2[%c1, %c0_9, %c0_10] : memref<3x32x32xf32, #tpu.memory_space<vmem>>, vector<1x32x32xf32>
    %10 = vector.shape_cast %9 : vector<1x32x32xf32> to vector<32x32xf32>
    %cst_11 = arith.constant dense<0.000000e+00> : vector<16x32xf32>
    %11 = tpu.matmul %0, %10, %cst_11 {dimension_numbers = #tpu.dot_dimension_numbers<[1], [0], [0], [1], [0, 0, 1, 1], [], []>} : vector<16x32xf32>, vector<32x32xf32>, vector<16x32xf32> -> vector<16x32xf32>
    %c1_12 = arith.constant 1 : index
    %c0_13 = arith.constant 0 : index
    %c0_14 = arith.constant 0 : index
    %12 = vector.load %arg3[%c1_12, %c0_13, %c0_14] : memref<3x1x32xf32, #tpu.memory_space<vmem>>, vector<1x1x32xf32>
    %13 = vector.shape_cast %12 : vector<1x1x32xf32> to vector<1x32xf32>
    %14 = vector.broadcast %13 : vector<1x32xf32> to vector<16x32xf32>
    %15 = arith.addf %11, %14 : vector<16x32xf32>
    %c0_15 = arith.constant 0 : index
    %c0_16 = arith.constant 0 : index
    %16 = vector.load %arg5[%c0_15, %c0_16] : memref<16x32xf32, #tpu.memory_space<vmem>>, vector<16x32xf32>
    tpu.vector_store %arg5[%c0_15, %c0_16], %15 {strides = array<i32>} : memref<16x32xf32, #tpu.memory_space<vmem>>, vector<16x32xf32>,
    %c2 = arith.constant 2 : index
    %c0_17 = arith.constant 0 : index
    %c0_18 = arith.constant 0 : index
    %17 = vector.load %arg2[%c2, %c0_17, %c0_18] : memref<3x32x32xf32, #tpu.memory_space<vmem>>, vector<1x32x32xf32>
    %18 = vector.shape_cast %17 : vector<1x32x32xf32> to vector<32x32xf32>
    %cst_19 = arith.constant dense<0.000000e+00> : vector<16x32xf32>
    %19 = tpu.matmul %0, %18, %cst_19 {dimension_numbers = #tpu.dot_dimension_numbers<[1], [0], [0], [1], [0, 0, 1, 1], [], []>} : vector<16x32xf32>, vector<32x32xf32>, vector<16x32xf32> -> vector<16x32xf32>
    %c2_20 = arith.constant 2 : index
    %c0_21 = arith.constant 0 : index
    %c0_22 = arith.constant 0 : index
    %20 = vector.load %arg3[%c2_20, %c0_21, %c0_22] : memref<3x1x32xf32, #tpu.memory_space<vmem>>, vector<1x1x32xf32>
    %21 = vector.shape_cast %20 : vector<1x1x32xf32> to vector<1x32xf32>
    %22 = vector.broadcast %21 : vector<1x32xf32> to vector<16x32xf32>
    %23 = arith.addf %19, %22 : vector<16x32xf32>
    %c0_23 = arith.constant 0 : index
    %c0_24 = arith.constant 0 : index
    %24 = vector.load %arg6[%c0_23, %c0_24] : memref<16x32xf32, #tpu.memory_space<vmem>>, vector<16x32xf32>
    tpu.vector_store %arg6[%c0_23, %c0_24], %23 {strides = array<i32>} : memref<16x32xf32, #tpu.memory_space<vmem>>, vector<16x32xf32>,
    return
  }
  func.func @transform_0(%arg0: i32) -> (i32, i32) {
    %c0_i32 = arith.constant 0 : i32
    %c0_i32_0 = arith.constant 0 : i32
    return %arg0, %c0_i32 : i32, i32
  }
  func.func @transform_1(%arg0: i32) -> (i32, i32, i32) {
    %c0_i32 = arith.constant 0 : i32
    %c0_i32_0 = arith.constant 0 : i32
    %c0_i32_1 = arith.constant 0 : i32
    %c0_i32_2 = arith.constant 0 : i32
    return %c0_i32, %c0_i32_0, %c0_i32_1 : i32, i32, i32
  }
  func.func @transform_2(%arg0: i32) -> (i32, i32, i32) {
    %c0_i32 = arith.constant 0 : i32
    %c0_i32_0 = arith.constant 0 : i32
    %c0_i32_1 = arith.constant 0 : i32
    %c0_i32_2 = arith.constant 0 : i32
    return %c0_i32, %c0_i32_0, %c0_i32_1 : i32, i32, i32
  }
  func.func @transform_3(%arg0: i32) -> (i32, i32) {
    %c0_i32 = arith.constant 0 : i32
    %c0_i32_0 = arith.constant 0 : i32
    return %arg0, %c0_i32 : i32, i32
  }
  func.func @transform_4(%arg0: i32) -> (i32, i32) {
    %c0_i32 = arith.constant 0 : i32
    %c0_i32_0 = arith.constant 0 : i32
    return %arg0, %c0_i32 : i32, i32
  }
  func.func @transform_5(%arg0: i32) -> (i32, i32) {
    %c0_i32 = arith.constant 0 : i32
    %c0_i32_0 = arith.constant 0 : i32
    return %arg0, %c0_i32 : i32, i32
  }
}

</mosaic_0001>

<llo_original>
// kernel: tpu_custom_call.1
$region0: #{tpu_custom_call.1}
  #allocation0 [shape = 'u32[]', space=smem, size = 0x4, offset = 0x4, fixed_abs, tag = 'smem constant byte address 0x4 - core index']
  #allocation1 [shape = 'u32[72,128]{1,0:T(1,128)}', space=vmem, size = 0x9000, scoped, tag = 'internal scratch']
  %s0 = inlined_call_operand.hbm [shape: f32[16,32], index: 0, kind: input, shape index: {}]
  %s1 = inlined_call_operand.hbm [shape: f32[3,32,32], index: 1, kind: input, shape index: {}]
  %s2 = inlined_call_operand.hbm [shape: f32[3,1,32], index: 2, kind: input, shape index: {}]
  %s3 = inlined_call_operand.hbm [shape: f32[16,32], index: 3, kind: output, shape index: {0}]
  %s4 = inlined_call_operand.hbm [shape: f32[16,32], index: 4, kind: output, shape index: {1}]
  %s5 = inlined_call_operand.hbm [shape: f32[16,32], index: 5, kind: output, shape index: {2}]
  %6 = xla_tuple %s3, %s4, %s5
  %s7 = sld [smem:[#allocation0]]
  $region50: #{tpu_custom_call.1} parent=0
    _
  %s9 = ssub.s32 1, %s7
  %s10 = scalar_select 0, %s9, %s7
  $region1: #{tpu_custom_call.1} parent=0
    #allocation2 [shape = 'u8[8192]{0}', space=vmem, size = 0x2000, scoped, tag = 'input window, operand 0, single buffered']
    #allocation3 [shape = 's32[1]{0}', space=sflag, size = 0x4, scoped, tag = 'scoped memory for tpu_custom_call.1']
    #allocation4 [shape = 's32[1]{0}', space=sflag, size = 0x4, scoped, tag = 'scoped memory for tpu_custom_call.1']
    #allocation5 [shape = 'u8[49152]{0}', space=vmem, size = 0xc000, scoped, tag = 'input window, operand 1, single buffered']
    #allocation6 [shape = 's32[1]{0}', space=sflag, size = 0x4, scoped, tag = 'scoped memory for tpu_custom_call.1']
    #allocation7 [shape = 'u8[1536]{0}', space=vmem, size = 0x800, scoped, tag = 'input window, operand 2, single buffered']
    #allocation8 [shape = 'u8[8192]{0}', space=vmem, size = 0x2000, scoped, tag = 'output window, operand 0, single buffered']
    #allocation9 [shape = 'u8[8192]{0}', space=vmem, size = 0x2000, scoped, tag = 'output window, operand 1, single buffered']
    #allocation10 [shape = 's32[1]{0}', space=sflag, size = 0x4, scoped, tag = 'scoped memory for tpu_custom_call.1']
    #allocation11 [shape = 'u8[8192]{0}', space=vmem, size = 0x2000, scoped, tag = 'output window, operand 2, single buffered']
    %11 = vsyncpa [#allocation3], 0
    %12 = vsyncpa [#allocation6], 0
    %13 = vsyncpa [#allocation4], 0
    %14 = vsyncpa [#allocation10], 0
    // Predicated region
    $region2: #{tpu_custom_call.1} parent=1 // pred_check
      _
    $region3: #{tpu_custom_call.1} parent=1 // pred_check_branch
      %16 = sbr.rel (0) target = $region5
    $region4: #{tpu_custom_call.1} parent=1 // pred_region
      %18 = vsyncadd [#allocation3], 0
      %s19 = sshll.u32 %s0, 4
      %s20 = int_to_ptr.hbm [resolvable:$true] %s19
      %s21 = sshll.u32 [#allocation2], 4
      %s22 = int_to_ptr.vmem [resolvable:$true] %s21
      %27 = dma.hbm_to_vmem [thread:$0]  %s20, 256, %s22, [#allocation3], 128, 128, 8
    $region5: #{tpu_custom_call.1} parent=1 // pred_fallthru
      _
    // Predicated region
    $region6: #{tpu_custom_call.1} parent=1 // pred_check
      _
    $region7: #{tpu_custom_call.1} parent=1 // pred_check_branch
      %29 = sbr.rel (0) target = $region9
    $region8: #{tpu_custom_call.1} parent=1 // pred_region
      %31 = vsyncadd [#allocation6], 0
      %s32 = sshll.u32 %s1, 4
      %s33 = int_to_ptr.hbm [resolvable:$true] %s32
      %s34 = sshll.u32 [#allocation5], 4
      %s35 = int_to_ptr.vmem [resolvable:$true] %s34
      %40 = dma.hbm_to_vmem [thread:$0]  %s33, 1536, %s35, [#allocation6], 128, 128, 8
    $region9: #{tpu_custom_call.1} parent=1 // pred_fallthru
      _
    // Predicated region
    $region10: #{tpu_custom_call.1} parent=1 // pred_check
      _
    $region11: #{tpu_custom_call.1} parent=1 // pred_check_branch
      %42 = sbr.rel (0) target = $region13
    $region12: #{tpu_custom_call.1} parent=1 // pred_region
      %44 = vsyncadd [#allocation6], 0
      %s45 = sshll.u32 %s2, 4
      %s46 = int_to_ptr.hbm [resolvable:$true] %s45
      %s47 = sshll.u32 [#allocation7], 4
      %s48 = int_to_ptr.vmem [resolvable:$true] %s47
      %53 = dma.hbm_to_vmem [thread:$0]  %s46, 48, %s48, [#allocation6], 16, 16, 1
    $region13: #{tpu_custom_call.1} parent=1 // pred_fallthru
      _
    // Predicated region
    $region14: #{tpu_custom_call.1} parent=1 // pred_check
      _
    $region15: #{tpu_custom_call.1} parent=1 // pred_check_branch
      %55 = sbr.rel (0) target = $region17
    $region16: #{tpu_custom_call.1} parent=1 // pred_region
      %57 = dma.done [#allocation3], 256
    $region17: #{tpu_custom_call.1} parent=1 // pred_fallthru
      _
    // Predicated region
    $region18: #{tpu_custom_call.1} parent=1 // pred_check
      _
    $region19: #{tpu_custom_call.1} parent=1 // pred_check_branch
      %59 = sbr.rel (0) target = $region21
    $region20: #{tpu_custom_call.1} parent=1 // pred_region
      %61 = dma.done [#allocation6], 1536
    $region21: #{tpu_custom_call.1} parent=1 // pred_fallthru
      _
    // Predicated region
    $region22: #{tpu_custom_call.1} parent=1 // pred_check
      _
    $region23: #{tpu_custom_call.1} parent=1 // pred_check_branch
      %63 = sbr.rel (0) target = $region25
    $region24: #{tpu_custom_call.1} parent=1 // pred_region
      %65 = dma.done [#allocation6], 48
    $region25: #{tpu_custom_call.1} parent=1 // pred_fallthru
      _
    %v66 = vld [vmem:[#allocation2] sm:$0xff]
    %v67 = vld [vmem:[#allocation2 + $0x8] sm:$0xff]
    %v68 = vld [vmem:[#allocation5] sm:$0xff]
    %v69 = vld [vmem:[#allocation5 + $0x8] sm:$0xff]
    %v70 = vld [vmem:[#allocation5 + $0x10] sm:$0xff]
    %v71 = vld [vmem:[#allocation5 + $0x18] sm:$0xff]
    %v72 = vld [vmem:[#allocation7] sm:$0x1]
    %v74 = vperm.slane %v72, 0
    %vm76 = vcmask 261120
    %v78 = vsel %vm76, %v66, 0
    %v81 = vsel %vm76, %v67, 0
    %83 = vmatpush.msra.mxu0 0.0
    %84 = vmatpush.msra.mxu0 0.0
    %85 = vmatpush.msra.mxu0 0.0
    %86 = vmatpush.msra.mxu0 0.0
    %87 = vmatpush.msra.mxu0 0.0
    %88 = vmatpush.msra.mxu0 0.0
    %89 = vmatpush.msra.mxu0 0.0
    %90 = vmatpush.msra.mxu0 0.0
    %91 = vmatpush.msra.mxu0 0.0
    %92 = vmatpush.msra.mxu0 0.0
    %93 = vmatpush.msra.mxu0 0.0
    %94 = vmatpush.msra.mxu0 0.0
    %95 = vmatpush.msra.mxu0 %v71
    %96 = vmatpush.msra.mxu0 %v70
    %97 = vmatpush.msra.mxu0 %v69
    %98 = vmatpush.msra.mxu0 %v68
    %99 = vmatmul.f32.gmra.mxu0 %v78
    %v100 = vpop.f32.mrf.mxu0
    %v101 = vadd.f32 %v74, %v100
    %102 = vmatmul.f32.gmra.mxu0 %v81
    %v103 = vpop.f32.mrf.mxu0
    %v104 = vadd.f32 %v74, %v103
    %105 = vdwg.mxu0
    %106 = vst.msk [vmem:[#allocation8] sm:$0xff] %vm76, %v101
    %107 = vst.msk [vmem:[#allocation8 + $0x8] sm:$0xff] %vm76, %v104
    %s108 = scalar_lea.vmem [#allocation5], 32
    %v109 = vld [vmem:[%s108] sm:$0xff]
    %v110 = vld [vmem:[%s108 + $0x8] sm:$0xff]
    %v111 = vld [vmem:[%s108 + $0x10] sm:$0xff]
    %v112 = vld [vmem:[%s108 + $0x18] sm:$0xff]
    %s113 = scalar_lea.vmem [#allocation7], 1
    %v114 = vld [vmem:[%s113] sm:$0x1]
    %v116 = vperm.slane %v114, 0
    %118 = vmatpush.msra.mxu0 0.0
    %119 = vmatpush.msra.mxu0 0.0
    %120 = vmatpush.msra.mxu0 0.0
    %121 = vmatpush.msra.mxu0 0.0
    %122 = vmatpush.msra.mxu0 0.0
    %123 = vmatpush.msra.mxu0 0.0
    %124 = vmatpush.msra.mxu0 0.0
    %125 = vmatpush.msra.mxu0 0.0
    %126 = vmatpush.msra.mxu0 0.0
    %127 = vmatpush.msra.mxu0 0.0
    %128 = vmatpush.msra.mxu0 0.0
    %129 = vmatpush.msra.mxu0 0.0
    %130 = vmatpush.msra.mxu0 %v112
    %131 = vmatpush.msra.mxu0 %v111
    %132 = vmatpush.msra.mxu0 %v110
    %133 = vmatpush.msra.mxu0 %v109
    %134 = vmatmul.f32.gmra.mxu0 %v78
    %v135 = vpop.f32.mrf.mxu0
    %v136 = vadd.f32 %v116, %v135
    %137 = vmatmul.f32.gmra.mxu0 %v81
    %v138 = vpop.f32.mrf.mxu0
    %v139 = vadd.f32 %v116, %v138
    %140 = vdwg.mxu0
    %141 = vst.msk [vmem:[#allocation9] sm:$0xff] %vm76, %v136
    %142 = vst.msk [vmem:[#allocation9 + $0x8] sm:$0xff] %vm76, %v139
    %s143 = scalar_lea.vmem [#allocation5], 64
    %v144 = vld [vmem:[%s143] sm:$0xff]
    %v145 = vld [vmem:[%s143 + $0x8] sm:$0xff]
    %v146 = vld [vmem:[%s143 + $0x10] sm:$0xff]
    %v147 = vld [vmem:[%s143 + $0x18] sm:$0xff]
    %s148 = scalar_lea.vmem [#allocation7], 2
    %v149 = vld [vmem:[%s148] sm:$0x1]
    %v151 = vperm.slane %v149, 0
    %153 = vmatpush.msra.mxu0 0.0
    %154 = vmatpush.msra.mxu0 0.0
    %155 = vmatpush.msra.mxu0 0.0
    %156 = vmatpush.msra.mxu0 0.0
    %157 = vmatpush.msra.mxu0 0.0
    %158 = vmatpush.msra.mxu0 0.0
    %159 = vmatpush.msra.mxu0 0.0
    %160 = vmatpush.msra.mxu0 0.0
    %161 = vmatpush.msra.mxu0 0.0
    %162 = vmatpush.msra.mxu0 0.0
    %163 = vmatpush.msra.mxu0 0.0
    %164 = vmatpush.msra.mxu0 0.0
    %165 = vmatpush.msra.mxu0 %v147
    %166 = vmatpush.msra.mxu0 %v146
    %167 = vmatpush.msra.mxu0 %v145
    %168 = vmatpush.msra.mxu0 %v144
    %169 = vmatmul.f32.gmra.mxu0 %v78
    %v170 = vpop.f32.mrf.mxu0
    %v171 = vadd.f32 %v151, %v170
    %172 = vmatmul.f32.gmra.mxu0 %v81
    %v173 = vpop.f32.mrf.mxu0
    %v174 = vadd.f32 %v151, %v173
    %175 = vdwg.mxu0
    %176 = vst.msk [vmem:[#allocation11] sm:$0xff] %vm76, %v171
    %177 = vst.msk [vmem:[#allocation11 + $0x8] sm:$0xff] %vm76, %v174
    // Predicated region
    $region26: #{tpu_custom_call.1} parent=1 // pred_check
      _
    $region27: #{tpu_custom_call.1} parent=1 // pred_check_branch
      %179 = sbr.rel (0) target = $region29
    $region28: #{tpu_custom_call.1} parent=1 // pred_region
      %181 = vsyncadd [#allocation4], 0
      %s182 = sshll.u32 [#allocation8], 4
      %s183 = int_to_ptr.vmem [resolvable:$true] %s182
      %s184 = sshll.u32 %s3, 4
      %s185 = int_to_ptr.hbm [resolvable:$true] %s184
      %190 = dma.vmem_to_hbm [thread:$0]  %s183, 256, %s185, [#allocation4], 128, 128, 8
    $region29: #{tpu_custom_call.1} parent=1 // pred_fallthru
      _
    // Predicated region
    $region30: #{tpu_custom_call.1} parent=1 // pred_check
      _
    $region31: #{tpu_custom_call.1} parent=1 // pred_check_branch
      %192 = sbr.rel (0) target = $region33
    $region32: #{tpu_custom_call.1} parent=1 // pred_region
      %194 = vsyncadd [#allocation10], 0
      %s195 = sshll.u32 [#allocation9], 4
      %s196 = int_to_ptr.vmem [resolvable:$true] %s195
      %s197 = sshll.u32 %s4, 4
      %s198 = int_to_ptr.hbm [resolvable:$true] %s197
      %203 = dma.vmem_to_hbm [thread:$0]  %s196, 256, %s198, [#allocation10], 128, 128, 8
    $region33: #{tpu_custom_call.1} parent=1 // pred_fallthru
      _
    // Predicated region
    $region34: #{tpu_custom_call.1} parent=1 // pred_check
      _
    $region35: #{tpu_custom_call.1} parent=1 // pred_check_branch
      %205 = sbr.rel (0) target = $region37
    $region36: #{tpu_custom_call.1} parent=1 // pred_region
      %207 = vsyncadd [#allocation10], 0
      %s208 = sshll.u32 [#allocation11], 4
      %s209 = int_to_ptr.vmem [resolvable:$true] %s208
      %s210 = sshll.u32 %s5, 4
      %s211 = int_to_ptr.hbm [resolvable:$true] %s210
      %216 = dma.vmem_to_hbm [thread:$0]  %s209, 256, %s211, [#allocation10], 128, 128, 8
    $region37: #{tpu_custom_call.1} parent=1 // pred_fallthru
      _
    // Predicated region
    $region38: #{tpu_custom_call.1} parent=1 // pred_check
      _
    $region39: #{tpu_custom_call.1} parent=1 // pred_check_branch
      %218 = sbr.rel (0) target = $region41
    $region40: #{tpu_custom_call.1} parent=1 // pred_region
      %220 = dma.done [#allocation4], 256
    $region41: #{tpu_custom_call.1} parent=1 // pred_fallthru
      _
    // Predicated region
    $region42: #{tpu_custom_call.1} parent=1 // pred_check
      _
    $region43: #{tpu_custom_call.1} parent=1 // pred_check_branch
      %222 = sbr.rel (0) target = $region45
    $region44: #{tpu_custom_call.1} parent=1 // pred_region
      %224 = dma.done [#allocation10], 256
    $region45: #{tpu_custom_call.1} parent=1 // pred_fallthru
      _
    // Predicated region
    $region46: #{tpu_custom_call.1} parent=1 // pred_check
      _
    $region47: #{tpu_custom_call.1} parent=1 // pred_check_branch
      %226 = sbr.rel (0) target = $region49
    $region48: #{tpu_custom_call.1} parent=1 // pred_region
      %228 = dma.done [#allocation10], 256
    $region49: #{tpu_custom_call.1} parent=1 // pred_fallthru
      _
    %229 = vsyncpa [#allocation3], 1
    %230 = vsyncpa [#allocation6], 1
    %231 = vsyncpa [#allocation4], 1
    %232 = vsyncpa [#allocation10], 1

</llo_original>
